<compile_context>
chip_gen: v5e
topology: v5e:2x2
jax: 0.10.0
libtpu: 0.0.40
codegen_flags: <defaults>
</compile_context>

<pallas_src>
import functools

import jax
import jax.numpy as jnp
from jax.experimental import pallas as pl
from jax.experimental.pallas import tpu as pltpu

EUCLID_WEIGHT = 1.0          # losses['euclidean distance']['weight']
ROW_DOWNWEIGHT_IDX = 4       # loss_vec[:, 4, :] *= 0.01
ROW_DOWNWEIGHT = 0.01

_LANE = 128                  # lane width
_CHUNK_ROWS = 32             # rows per inner-loop step (bounds live vregs)
_MAX_TILE_ROWS = 1024        # 7*1024*128*4B ~= 3.7 MB per block
_STAT_ROWS = 16              # 13 stats padded to a sublane multiple


def _round_up(x, m):
    return ((x + m - 1) // m) * m


# -----------------------------------------------------------------------------
# Pallas kernel: fused alignment loss + gradient sufficient statistics.
#
#   params_ref : SMEM f32[16] = [M00..M22 (row major), t0, t1, t2, pad x4]
#                with M = diag(s, s, 1) @ R (xy scale folded into R).
#   pts_ref    : VMEM f32[7, r_tile, 128]
#                rows 0-2: desired xyz planes, rows 3-5: source xyz planes,
#                row  6  : per-point weight (1.0 / 0.01 / 0.0 padding).
#   out_ref    : VMEM f32[16, 128] lane-partial accumulator (resident across
#                the reduction grid axis):
#       row 0      sum_i w_i |e_i|^2                 (-> loss)
#       rows 1-3   sum_i w_i e_i[b]                  (-> dL/dt)
#       rows 4-12  sum_i w_i p_i[a] e_i[b]  (4+3a+b) (-> dL/dM)
#   where e_i = (p_i @ M + t) - d_i   (row-vector convention).
# -----------------------------------------------------------------------------
def _align_stats_kernel(params_ref, pts_ref, out_ref, *, n_chunks):
    @pl.when(pl.program_id(1) == 0)
    def _init():
        out_ref[...] = jnp.zeros_like(out_ref)

    M00 = params_ref[0]; M01 = params_ref[1]; M02 = params_ref[2]
    M10 = params_ref[3]; M11 = params_ref[4]; M12 = params_ref[5]
    M20 = params_ref[6]; M21 = params_ref[7]; M22 = params_ref[8]
    t0 = params_ref[9]; t1 = params_ref[10]; t2 = params_ref[11]

    @pl.loop(0, n_chunks)
    def _chunk(c):
        r0 = pl.multiple_of(c * _CHUNK_ROWS, _CHUNK_ROWS)
        rows = pl.ds(r0, _CHUNK_ROWS)
        dx = pts_ref[0, rows, :]
        dy = pts_ref[1, rows, :]
        dz = pts_ref[2, rows, :]
        px = pts_ref[3, rows, :]
        py = pts_ref[4, rows, :]
        pz = pts_ref[5, rows, :]
        w = pts_ref[6, rows, :]

        ex = px * M00 + py * M10 + pz * M20 + t0 - dx
        ey = px * M01 + py * M11 + pz * M21 + t1 - dy
        ez = px * M02 + py * M12 + pz * M22 + t2 - dz
        wex = w * ex
        wey = w * ey
        wez = w * ez

        def _acc(k, v):
            out_ref[k:k + 1, :] += jnp.sum(v, axis=0, keepdims=True)

        _acc(0, ex * wex + ey * wey + ez * wez)
        _acc(1, wex)
        _acc(2, wey)
        _acc(3, wez)
        _acc(4, px * wex)
        _acc(5, px * wey)
        _acc(6, px * wez)
        _acc(7, py * wex)
        _acc(8, py * wey)
        _acc(9, py * wez)
        _acc(10, pz * wex)
        _acc(11, pz * wey)
        _acc(12, pz * wez)


def _alignment_stats(packed, layout, M, t3):
    """One fused Pallas pass -> f32[16] sufficient statistics (see kernel)."""
    r_tile, split, tiles_per_split = layout
    params = jnp.concatenate(
        [jnp.reshape(M, (9,)), jnp.reshape(t3, (3,)),
         jnp.zeros((4,), jnp.float32)]).astype(jnp.float32)
    kernel = functools.partial(_align_stats_kernel,
                               n_chunks=r_tile // _CHUNK_ROWS)
    partials = pl.pallas_call(
        kernel,
        out_shape=jax.ShapeDtypeStruct((split, _STAT_ROWS, _LANE), jnp.float32),
        grid=(split, tiles_per_split),
        in_specs=[
            pl.BlockSpec(memory_space=pltpu.MemorySpace.SMEM),   # params (untiled)
            pl.BlockSpec((7, r_tile, _LANE),
                         lambda c, i: (0, c * tiles_per_split + i, 0)),
        ],
        out_specs=pl.BlockSpec((None, _STAT_ROWS, _LANE), lambda c, i: (c, 0, 0)),
        compiler_params=pltpu.CompilerParams(
            # leading axis: per-TensorCore partials (2x on v7x, no-op elsewhere)
            # trailing axis: point-tile reduction
            dimension_semantics=("parallel", "arbitrary")),
    )(params, packed)
    return jnp.sum(partials, axis=(0, 2))   # f32[16]


# -----------------------------------------------------------------------------
# Layout packing + pose helpers
# -----------------------------------------------------------------------------
def _pack_point_clouds(pc_des, pc_src):
    """(B, N, 3) x2 -> (7, R_pad, 128) planes (des xyz, src xyz, weight)."""
    B, N, _ = pc_des.shape
    P = B * N
    rows_needed = max(1, -(-P // _LANE))
    r_tile = min(_MAX_TILE_ROWS, _round_up(rows_needed, _CHUNK_ROWS))
    tiles = -(-rows_needed // r_tile)
    split = 2 if tiles >= 2 else 1          # per-core partials when worth it
    tiles = _round_up(tiles, split)
    r_rows = tiles * r_tile
    p_pad = r_rows * _LANE

    def planes(pc):
        flat = jnp.transpose(jnp.reshape(pc.astype(jnp.float32), (P, 3)))  # (3, P)
        return jnp.pad(flat, ((0, 0), (0, p_pad - P)))

    # NOTE: assumes N > ROW_DOWNWEIGHT_IDX (the torch module would raise
    # otherwise); padded points get weight 0 so they contribute nothing.
    idx = jnp.arange(p_pad)
    w = jnp.where(idx < P,
                  jnp.where(idx % N == ROW_DOWNWEIGHT_IDX, ROW_DOWNWEIGHT, 1.0),
                  0.0).astype(jnp.float32)
    packed = jnp.concatenate([planes(pc_des), planes(pc_src), w[None, :]], axis=0)
    packed = jnp.reshape(packed, (7, r_rows, _LANE))
    layout = (r_tile, split, tiles // split)
    return packed, layout


def _rodrigues(r):
    """R = I + A*K + B*K^2 (row-vector convention, same as torch helper)."""
    theta2 = jnp.sum(r * r)
    small = theta2 < 1e-12
    theta2_safe = jnp.where(small, 1.0, theta2)
    theta_safe = jnp.sqrt(theta2_safe)
    A = jnp.where(small, 1.0 - theta2 / 6.0, jnp.sin(theta_safe) / theta_safe)
    Bc = jnp.where(small, 0.5 - theta2 / 24.0,
                   (1.0 - jnp.cos(theta_safe)) / theta2_safe)
    r0, r1, r2 = r[0], r[1], r[2]
    K = jnp.array([[0.0, -r2, r1],
                   [r2, 0.0, -r0],
                   [-r1, r0, 0.0]], dtype=jnp.float32)
    return jnp.eye(3, dtype=jnp.float32) + A * K + Bc * (K @ K)


def _pose_matrices(r, t, s):
    r3 = jnp.reshape(r, (3,)).astype(jnp.float32)
    t3 = jnp.reshape(t, (3,)).astype(jnp.float32)
    sf = jnp.asarray(s, jnp.float32)
    R = _rodrigues(r3)
    scale_col = jnp.stack([sf, sf, jnp.float32(1.0)])[:, None]   # (3, 1)
    M = R * scale_col                                            # diag(s,s,1) @ R
    return r3, t3, sf, R, scale_col, M


# -----------------------------------------------------------------------------
# Loss + analytic gradients from a single kernel pass (shared fwd/bwd)
# -----------------------------------------------------------------------------
def alignment_loss_and_grads(packed, layout, B, N, r, t, s):
    r3, t3, _, R, scale_col, M = _pose_matrices(r, t, s)
    stats = _alignment_stats(packed, layout, M, t3)

    c = 1.0 / float(B * N * 3)                    # torch .mean() denominator
    loss = stats[0] * c
    dLdt = 2.0 * c * stats[1:4]                   # (3,)
    dLdM = 2.0 * c * jnp.reshape(stats[4:13], (3, 3))
    dLdR = dLdM * scale_col                       # M[a,b] = s_a * R[a,b]
    dLds = jnp.sum(dLdM[0:2, :] * R[0:2, :])
    _, rod_vjp = jax.vjp(_rodrigues, r3)          # tiny 3x3 chain rule in JAX
    (dLdr,) = rod_vjp(dLdR)
    return loss, (jnp.reshape(dLdr, (1, 3)), jnp.reshape(dLdt, (1, 3)), dLds)


# -----------------------------------------------------------------------------
# Model forward (PointCloudAlignmentOptimizationModel.forward)
# -----------------------------------------------------------------------------
def _normal_from_triangle(p1, p2, p3):
    return jnp.cross(p3 - p1, p2 - p1)


def model_forward(pc_des, pc_src, r, t, s):
    """Returns the shape-(1,) loss like the torch module."""
    B, N, _ = pc_des.shape
    packed, layout = _pack_point_clouds(pc_des, pc_src)
    _, t3, _, _, _, M = _pose_matrices(r, t, s)
    stats = _alignment_stats(packed, layout, M, t3)
    base = stats[0] / float(B * N * 3)

    # zero-weighted normal/cosine term: only the first 3 transformed points of
    # batch 0 are needed -> plain JAX (the full transformed cloud is not built).
    d3 = pc_des[0, :3].astype(jnp.float32)
    p3 = pc_src[0, :3].astype(jnp.float32) @ M + t3
    nd = _normal_from_triangle(d3[0], d3[1], d3[2])
    nt = _normal_from_triangle(p3[0], p3[1], p3[2])
    cos = jnp.sum(nd * nt) / (jnp.maximum(jnp.linalg.norm(nd), 1e-8) *
                              jnp.maximum(jnp.linalg.norm(nt), 1e-8))
    loss_normal = jnp.reshape(1.0 - cos, (1,))
    return base * EUCLID_WEIGHT + 0.0 * loss_normal


# -----------------------------------------------------------------------------
# Pure-JAX replica (verification only)
# -----------------------------------------------------------------------------
def _ref_forward(pc_des, pc_src, r, t, s):
    R = _rodrigues(jnp.reshape(r, (3,)).astype(jnp.float32))
    sf = jnp.asarray(s, jnp.float32)
    scale_vec = jnp.stack([sf, sf, jnp.float32(1.0)])
    pct = (pc_src.astype(jnp.float32) * scale_vec) @ R \
        + jnp.reshape(t, (1, 1, 3)).astype(jnp.float32)
    lv = (pc_des.astype(jnp.float32) - pct) ** 2
    lv = lv.at[:, ROW_DOWNWEIGHT_IDX, :].multiply(ROW_DOWNWEIGHT)
    return jnp.mean(lv), pct


# -----------------------------------------------------------------------------
# Outer module (PointCloudAlignmentOptimization.forward): fused Adam loop
# -----------------------------------------------------------------------------
def point_cloud_alignment_optimization(pc_des, pc_src, iterations=20, lr=0.01):
    B, N, _ = pc_des.shape
    packed, layout = _pack_point_clouds(pc_des, pc_src)   # packed once, reused
    b1, b2, eps = 0.9, 0.999, 1e-8                        # torch.optim.Adam defaults

    def run(packed_):
        def adam_step(carry, i):
            r, t, s, m_r, m_t, m_s, v_r, v_t, v_s = carry
            loss, (g_r, g_t, g_s) = alignment_loss_and_grads(
                packed_, layout, B, N, r, t, s)
            step = (i + 1).astype(jnp.float32)

            def upd(p, g, m, v):
                m = b1 * m + (1.0 - b1) * g
                v = b2 * v + (1.0 - b2) * (g * g)
                mhat = m / (1.0 - b1 ** step)
                vhat = v / (1.0 - b2 ** step)
                return p - lr * mhat / (jnp.sqrt(vhat) + eps), m, v

            r, m_r, v_r = upd(r, g_r, m_r, v_r)
            t, m_t, v_t = upd(t, g_t, m_t, v_t)
            s, m_s, v_s = upd(s, g_s, m_s, v_s)
            return (r, t, s, m_r, m_t, m_s, v_r, v_t, v_s), loss

        z13 = jnp.zeros((1, 3), jnp.float32)
        z0 = jnp.zeros((), jnp.float32)
        init = (z13, z13, jnp.asarray(1.0, jnp.float32),
                z13, z13, z0,
                z13, z13, z0)
        carry, losses = jax.lax.scan(adam_step, init, jnp.arange(iterations))
        return carry[0], carry[1], carry[2], losses

    r_opt, t_opt, s_opt, losses = jax.jit(run)(packed)
    loss_history = [float(v) for v in jax.device_get(losses)]
    return (r_opt.astype(jnp.float32), t_opt.astype(jnp.float32),
            jnp.asarray(s_opt, jnp.float32), loss_history)


# -----------------------------------------------------------------------------
def _check_against_ref(pc_des, pc_src, test_points, loss_tol, grad_tol):
    B, N, _ = pc_des.shape
    packed, layout = _pack_point_clouds(pc_des, pc_src)
    ref_fn = lambda r_, t_, s_: _ref_forward(pc_des, pc_src, r_, t_, s_)[0]
    for r_c, t_c, s_c in test_points:
        loss_k, (gr_k, gt_k, gs_k) = alignment_loss_and_grads(
            packed, layout, B, N, r_c, t_c, s_c)
        loss_r = ref_fn(r_c, t_c, s_c)
        gr_r, gt_r, gs_r = jax.grad(ref_fn, argnums=(0, 1, 2))(r_c, t_c, s_c)
        assert jnp.allclose(loss_k, loss_r, rtol=loss_tol, atol=1e-6)
        assert jnp.allclose(gr_k, gr_r, rtol=grad_tol, atol=1e-4)
        assert jnp.allclose(gt_k, gt_r, rtol=grad_tol, atol=1e-4)
        assert jnp.allclose(gs_k, gs_r, rtol=grad_tol, atol=1e-4)


if __name__ == "__main__":
    key = jax.random.PRNGKey(0)
    k1, k2, k3, k4 = jax.random.split(key, 4)

    # ---------- small cloud (matches the module's typical keypoint use) ------
    B, N = 1, 8
    pc_src = jax.random.normal(k1, (B, N, 3), jnp.float32)
    true_r = jnp.array([0.2, -0.1, 0.3], jnp.float32)
    true_t = jnp.array([0.5, -0.25, 0.1], jnp.float32)
    true_s = jnp.float32(1.2)
    R_true = _rodrigues(true_r)
    pc_des = (pc_src * jnp.stack([true_s, true_s, jnp.float32(1.0)])) @ R_true \
        + true_t.reshape(1, 1, 3)
    pc_des = pc_des + 0.01 * jax.random.normal(k2, (B, N, 3), jnp.float32)

    test_points = [
        (jnp.zeros((1, 3), jnp.float32), jnp.zeros((1, 3), jnp.float32),
         jnp.float32(1.0)),
        (jnp.array([[0.05, -0.02, 0.03]], jnp.float32),
         jnp.array([[0.1, 0.2, -0.05]], jnp.float32), jnp.float32(1.1)),
    ]
    _check_against_ref(pc_des, pc_src, test_points, loss_tol=1e-4, grad_tol=1e-3)

    # exercise the module-forward path (includes the zero-weighted normal term)
    _ = jax.block_until_ready(
        model_forward(pc_des, pc_src, jnp.zeros((1, 3), jnp.float32),
                      jnp.zeros((1, 3), jnp.float32), jnp.float32(1.0)))

    # ---------- larger cloud: exercises 2-way core split + tile streaming ----
    Bb, Nb = 1, 300000
    pc_src_big = jax.random.normal(k3, (Bb, Nb, 3), jnp.float32)
    pc_des_big = (pc_src_big * jnp.stack([true_s, true_s, jnp.float32(1.0)])) \
        @ R_true + true_t.reshape(1, 1, 3)
    pc_des_big = pc_des_big + 0.01 * jax.random.normal(k4, (Bb, Nb, 3), jnp.float32)
    _check_against_ref(pc_des_big, pc_src_big, test_points[1:],
                       loss_tol=1e-3, grad_tol=2e-3)

    # ---------- fused Adam optimisation (single jit, 20 iterations) ----------
    r_opt, t_opt, s_opt, losses = point_cloud_alignment_optimization(
        pc_des, pc_src, iterations=20, lr=0.01)
    jax.block_until_ready((r_opt, t_opt, s_opt))
    assert losses[-1] <= losses[0]
    print("KERNEL_OK")
</pallas_src>

<mosaic_0001>
module attributes {stable_mosaic.version = 11 : i64} {
  func.func @_align_stats_kernel(%arg0: i32, %arg1: i32, %arg2: memref<16xf32, #tpu.memory_space<smem>>, %arg3: memref<7x32x128xf32, #tpu.memory_space<vmem>>, %arg4: memref<1x16x128xf32, #tpu.memory_space<vmem>>) attributes {dimension_semantics = [#tpu.dimension_semantics<parallel>, #tpu.dimension_semantics<arbitrary>], iteration_bounds = array<i64: 1, 1>, scalar_prefetch = 0 : i64, scratch_operands = 0 : i64, tpu.core_type = #tpu.core_type<tc>, window_params = [{transform_indices = @transform_0, window_bounds = array<i64: 16>}, {transform_indices = @transform_1, window_bounds = array<i64: 7, 32, 128>}, {transform_indices = @transform_2, window_bounds = array<i64: 1, 16, 128>}]} {
    %c0_i32 = arith.constant 0 : i32
    %0 = arith.cmpi eq, %arg1, %c0_i32 : i32
    %1 = arith.extui %0 : i1 to i32
    %c0_i32_0 = arith.constant 0 : i32
    %2 = arith.cmpi ne, %1, %c0_i32_0 : i32
    scf.if %2 {
      %cst_107 = arith.constant 0.000000e+00 : f32
      %194 = vector.broadcast %cst_107 : f32 to vector<16x128xf32>
      %c0_108 = arith.constant 0 : index
      %c0_109 = arith.constant 0 : index
      %c0_110 = arith.constant 0 : index
      %195 = vector.load %arg4[%c0_108, %c0_109, %c0_110] : memref<1x16x128xf32, #tpu.memory_space<vmem>>, vector<1x16x128xf32>
      %196 = vector.shape_cast %195 : vector<1x16x128xf32> to vector<16x128xf32>
      %197 = vector.shape_cast %194 : vector<16x128xf32> to vector<1x16x128xf32>
      tpu.vector_store %arg4[%c0_108, %c0_109, %c0_110], %197 {strides = array<i32>} : memref<1x16x128xf32, #tpu.memory_space<vmem>>, vector<1x16x128xf32>,
    } else {
    }
    %c0 = arith.constant 0 : index
    %3 = memref.load %arg2[%c0] : memref<16xf32, #tpu.memory_space<smem>>
    %c1 = arith.constant 1 : index
    %4 = memref.load %arg2[%c1] : memref<16xf32, #tpu.memory_space<smem>>
    %c2 = arith.constant 2 : index
    %5 = memref.load %arg2[%c2] : memref<16xf32, #tpu.memory_space<smem>>
    %c3 = arith.constant 3 : index
    %6 = memref.load %arg2[%c3] : memref<16xf32, #tpu.memory_space<smem>>
    %c4 = arith.constant 4 : index
    %7 = memref.load %arg2[%c4] : memref<16xf32, #tpu.memory_space<smem>>
    %c5 = arith.constant 5 : index
    %8 = memref.load %arg2[%c5] : memref<16xf32, #tpu.memory_space<smem>>
    %c6 = arith.constant 6 : index
    %9 = memref.load %arg2[%c6] : memref<16xf32, #tpu.memory_space<smem>>
    %c7 = arith.constant 7 : index
    %10 = memref.load %arg2[%c7] : memref<16xf32, #tpu.memory_space<smem>>
    %c8 = arith.constant 8 : index
    %11 = memref.load %arg2[%c8] : memref<16xf32, #tpu.memory_space<smem>>
    %c9 = arith.constant 9 : index
    %12 = memref.load %arg2[%c9] : memref<16xf32, #tpu.memory_space<smem>>
    %c10 = arith.constant 10 : index
    %13 = memref.load %arg2[%c10] : memref<16xf32, #tpu.memory_space<smem>>
    %c11 = arith.constant 11 : index
    %14 = memref.load %arg2[%c11] : memref<16xf32, #tpu.memory_space<smem>>
    %c0_i32_1 = arith.constant 0 : i32
    %c1_i32 = arith.constant 1 : i32
    %15 = arith.muli %c0_i32_1, %c1_i32 : i32
    %c0_i32_2 = arith.constant 0 : i32
    %16 = arith.addi %c0_i32_2, %15 : i32
    %c32_i32 = arith.constant 32 : i32
    %17 = arith.muli %16, %c32_i32 : i32
    %18 = tpu.assume_multiple %17, 32 : i32
    %c0_3 = arith.constant 0 : index
    %19 = arith.index_cast %18 : i32 to index
    %c0_4 = arith.constant 0 : index
    %20 = vector.load %arg3[%c0_3, %19, %c0_4] : memref<7x32x128xf32, #tpu.memory_space<vmem>>, vector<1x32x128xf32>
    %21 = vector.shape_cast %20 : vector<1x32x128xf32> to vector<32x128xf32>
    %c1_5 = arith.constant 1 : index
    %22 = arith.index_cast %18 : i32 to index
    %c0_6 = arith.constant 0 : index
    %23 = vector.load %arg3[%c1_5, %22, %c0_6] : memref<7x32x128xf32, #tpu.memory_space<vmem>>, vector<1x32x128xf32>
    %24 = vector.shape_cast %23 : vector<1x32x128xf32> to vector<32x128xf32>
    %c2_7 = arith.constant 2 : index
    %25 = arith.index_cast %18 : i32 to index
    %c0_8 = arith.constant 0 : index
    %26 = vector.load %arg3[%c2_7, %25, %c0_8] : memref<7x32x128xf32, #tpu.memory_space<vmem>>, vector<1x32x128xf32>
    %27 = vector.shape_cast %26 : vector<1x32x128xf32> to vector<32x128xf32>
    %c3_9 = arith.constant 3 : index
    %28 = arith.index_cast %18 : i32 to index
    %c0_10 = arith.constant 0 : index
    %29 = vector.load %arg3[%c3_9, %28, %c0_10] : memref<7x32x128xf32, #tpu.memory_space<vmem>>, vector<1x32x128xf32>
    %30 = vector.shape_cast %29 : vector<1x32x128xf32> to vector<32x128xf32>
    %c4_11 = arith.constant 4 : index
    %31 = arith.index_cast %18 : i32 to index
    %c0_12 = arith.constant 0 : index
    %32 = vector.load %arg3[%c4_11, %31, %c0_12] : memref<7x32x128xf32, #tpu.memory_space<vmem>>, vector<1x32x128xf32>
    %33 = vector.shape_cast %32 : vector<1x32x128xf32> to vector<32x128xf32>
    %c5_13 = arith.constant 5 : index
    %34 = arith.index_cast %18 : i32 to index
    %c0_14 = arith.constant 0 : index
    %35 = vector.load %arg3[%c5_13, %34, %c0_14] : memref<7x32x128xf32, #tpu.memory_space<vmem>>, vector<1x32x128xf32>
    %36 = vector.shape_cast %35 : vector<1x32x128xf32> to vector<32x128xf32>
    %c6_15 = arith.constant 6 : index
    %37 = arith.index_cast %18 : i32 to index
    %c0_16 = arith.constant 0 : index
    %38 = vector.load %arg3[%c6_15, %37, %c0_16] : memref<7x32x128xf32, #tpu.memory_space<vmem>>, vector<1x32x128xf32>
    %39 = vector.shape_cast %38 : vector<1x32x128xf32> to vector<32x128xf32>
    %40 = vector.broadcast %3 : f32 to vector<32x128xf32>
    %41 = arith.mulf %30, %40 : vector<32x128xf32>
    %42 = vector.broadcast %6 : f32 to vector<32x128xf32>
    %43 = arith.mulf %33, %42 : vector<32x128xf32>
    %44 = arith.addf %41, %43 : vector<32x128xf32>
    %45 = vector.broadcast %9 : f32 to vector<32x128xf32>
    %46 = arith.mulf %36, %45 : vector<32x128xf32>
    %47 = arith.addf %44, %46 : vector<32x128xf32>
    %48 = vector.broadcast %12 : f32 to vector<32x128xf32>
    %49 = arith.addf %47, %48 : vector<32x128xf32>
    %50 = arith.subf %49, %21 : vector<32x128xf32>
    %51 = vector.broadcast %4 : f32 to vector<32x128xf32>
    %52 = arith.mulf %30, %51 : vector<32x128xf32>
    %53 = vector.broadcast %7 : f32 to vector<32x128xf32>
    %54 = arith.mulf %33, %53 : vector<32x128xf32>
    %55 = arith.addf %52, %54 : vector<32x128xf32>
    %56 = vector.broadcast %10 : f32 to vector<32x128xf32>
    %57 = arith.mulf %36, %56 : vector<32x128xf32>
    %58 = arith.addf %55, %57 : vector<32x128xf32>
    %59 = vector.broadcast %13 : f32 to vector<32x128xf32>
    %60 = arith.addf %58, %59 : vector<32x128xf32>
    %61 = arith.subf %60, %24 : vector<32x128xf32>
    %62 = vector.broadcast %5 : f32 to vector<32x128xf32>
    %63 = arith.mulf %30, %62 : vector<32x128xf32>
    %64 = vector.broadcast %8 : f32 to vector<32x128xf32>
    %65 = arith.mulf %33, %64 : vector<32x128xf32>
    %66 = arith.addf %63, %65 : vector<32x128xf32>
    %67 = vector.broadcast %11 : f32 to vector<32x128xf32>
    %68 = arith.mulf %36, %67 : vector<32x128xf32>
    %69 = arith.addf %66, %68 : vector<32x128xf32>
    %70 = vector.broadcast %14 : f32 to vector<32x128xf32>
    %71 = arith.addf %69, %70 : vector<32x128xf32>
    %72 = arith.subf %71, %27 : vector<32x128xf32>
    %73 = arith.mulf %39, %50 : vector<32x128xf32>
    %74 = arith.mulf %39, %61 : vector<32x128xf32>
    %75 = arith.mulf %39, %72 : vector<32x128xf32>
    %76 = arith.mulf %50, %73 : vector<32x128xf32>
    %77 = arith.mulf %61, %74 : vector<32x128xf32>
    %78 = arith.addf %76, %77 : vector<32x128xf32>
    %79 = arith.mulf %72, %75 : vector<32x128xf32>
    %80 = arith.addf %78, %79 : vector<32x128xf32>
    %c0_17 = arith.constant 0 : index
    %c0_18 = arith.constant 0 : index
    %c0_19 = arith.constant 0 : index
    %81 = vector.load %arg4[%c0_17, %c0_18, %c0_19] : memref<1x16x128xf32, #tpu.memory_space<vmem>>, vector<1x1x128xf32>
    %82 = vector.shape_cast %81 : vector<1x1x128xf32> to vector<1x128xf32>
    %cst = arith.constant dense<0.000000e+00> : vector<128xf32>
    %83 = vector.multi_reduction <add>, %80, %cst [0] : vector<32x128xf32> to vector<128xf32>
    %84 = vector.shape_cast %83 : vector<128xf32> to vector<1x128xf32>
    %85 = arith.addf %82, %84 : vector<1x128xf32>
    %c0_20 = arith.constant 0 : index
    %c0_21 = arith.constant 0 : index
    %c0_22 = arith.constant 0 : index
    %86 = vector.load %arg4[%c0_20, %c0_21, %c0_22] : memref<1x16x128xf32, #tpu.memory_space<vmem>>, vector<1x1x128xf32>
    %87 = vector.shape_cast %86 : vector<1x1x128xf32> to vector<1x128xf32>
    %88 = vector.shape_cast %85 : vector<1x128xf32> to vector<1x1x128xf32>
    tpu.vector_store %arg4[%c0_20, %c0_21, %c0_22], %88 {strides = array<i32>} : memref<1x16x128xf32, #tpu.memory_space<vmem>>, vector<1x1x128xf32>,
    %c0_23 = arith.constant 0 : index
    %c1_24 = arith.constant 1 : index
    %c0_25 = arith.constant 0 : index
    %89 = vector.load %arg4[%c0_23, %c1_24, %c0_25] : memref<1x16x128xf32, #tpu.memory_space<vmem>>, vector<1x1x128xf32>
    %90 = vector.shape_cast %89 : vector<1x1x128xf32> to vector<1x128xf32>
    %cst_26 = arith.constant dense<0.000000e+00> : vector<128xf32>
    %91 = vector.multi_reduction <add>, %73, %cst_26 [0] : vector<32x128xf32> to vector<128xf32>
    %92 = vector.shape_cast %91 : vector<128xf32> to vector<1x128xf32>
    %93 = arith.addf %90, %92 : vector<1x128xf32>
    %c0_27 = arith.constant 0 : index
    %c1_28 = arith.constant 1 : index
    %c0_29 = arith.constant 0 : index
    %94 = vector.load %arg4[%c0_27, %c1_28, %c0_29] : memref<1x16x128xf32, #tpu.memory_space<vmem>>, vector<1x1x128xf32>
    %95 = vector.shape_cast %94 : vector<1x1x128xf32> to vector<1x128xf32>
    %96 = vector.shape_cast %93 : vector<1x128xf32> to vector<1x1x128xf32>
    tpu.vector_store %arg4[%c0_27, %c1_28, %c0_29], %96 {strides = array<i32>} : memref<1x16x128xf32, #tpu.memory_space<vmem>>, vector<1x1x128xf32>,
    %c0_30 = arith.constant 0 : index
    %c2_31 = arith.constant 2 : index
    %c0_32 = arith.constant 0 : index
    %97 = vector.load %arg4[%c0_30, %c2_31, %c0_32] : memref<1x16x128xf32, #tpu.memory_space<vmem>>, vector<1x1x128xf32>
    %98 = vector.shape_cast %97 : vector<1x1x128xf32> to vector<1x128xf32>
    %cst_33 = arith.constant dense<0.000000e+00> : vector<128xf32>
    %99 = vector.multi_reduction <add>, %74, %cst_33 [0] : vector<32x128xf32> to vector<128xf32>
    %100 = vector.shape_cast %99 : vector<128xf32> to vector<1x128xf32>
    %101 = arith.addf %98, %100 : vector<1x128xf32>
    %c0_34 = arith.constant 0 : index
    %c2_35 = arith.constant 2 : index
    %c0_36 = arith.constant 0 : index
    %102 = vector.load %arg4[%c0_34, %c2_35, %c0_36] : memref<1x16x128xf32, #tpu.memory_space<vmem>>, vector<1x1x128xf32>
    %103 = vector.shape_cast %102 : vector<1x1x128xf32> to vector<1x128xf32>
    %104 = vector.shape_cast %101 : vector<1x128xf32> to vector<1x1x128xf32>
    tpu.vector_store %arg4[%c0_34, %c2_35, %c0_36], %104 {strides = array<i32>} : memref<1x16x128xf32, #tpu.memory_space<vmem>>, vector<1x1x128xf32>,
    %c0_37 = arith.constant 0 : index
    %c3_38 = arith.constant 3 : index
    %c0_39 = arith.constant 0 : index
    %105 = vector.load %arg4[%c0_37, %c3_38, %c0_39] : memref<1x16x128xf32, #tpu.memory_space<vmem>>, vector<1x1x128xf32>
    %106 = vector.shape_cast %105 : vector<1x1x128xf32> to vector<1x128xf32>
    %cst_40 = arith.constant dense<0.000000e+00> : vector<128xf32>
    %107 = vector.multi_reduction <add>, %75, %cst_40 [0] : vector<32x128xf32> to vector<128xf32>
    %108 = vector.shape_cast %107 : vector<128xf32> to vector<1x128xf32>
    %109 = arith.addf %106, %108 : vector<1x128xf32>
    %c0_41 = arith.constant 0 : index
    %c3_42 = arith.constant 3 : index
    %c0_43 = arith.constant 0 : index
    %110 = vector.load %arg4[%c0_41, %c3_42, %c0_43] : memref<1x16x128xf32, #tpu.memory_space<vmem>>, vector<1x1x128xf32>
    %111 = vector.shape_cast %110 : vector<1x1x128xf32> to vector<1x128xf32>
    %112 = vector.shape_cast %109 : vector<1x128xf32> to vector<1x1x128xf32>
    tpu.vector_store %arg4[%c0_41, %c3_42, %c0_43], %112 {strides = array<i32>} : memref<1x16x128xf32, #tpu.memory_space<vmem>>, vector<1x1x128xf32>,
    %113 = arith.mulf %30, %73 : vector<32x128xf32>
    %c0_44 = arith.constant 0 : index
    %c4_45 = arith.constant 4 : index
    %c0_46 = arith.constant 0 : index
    %114 = vector.load %arg4[%c0_44, %c4_45, %c0_46] : memref<1x16x128xf32, #tpu.memory_space<vmem>>, vector<1x1x128xf32>
    %115 = vector.shape_cast %114 : vector<1x1x128xf32> to vector<1x128xf32>
    %cst_47 = arith.constant dense<0.000000e+00> : vector<128xf32>
    %116 = vector.multi_reduction <add>, %113, %cst_47 [0] : vector<32x128xf32> to vector<128xf32>
    %117 = vector.shape_cast %116 : vector<128xf32> to vector<1x128xf32>
    %118 = arith.addf %115, %117 : vector<1x128xf32>
    %c0_48 = arith.constant 0 : index
    %c4_49 = arith.constant 4 : index
    %c0_50 = arith.constant 0 : index
    %119 = vector.load %arg4[%c0_48, %c4_49, %c0_50] : memref<1x16x128xf32, #tpu.memory_space<vmem>>, vector<1x1x128xf32>
    %120 = vector.shape_cast %119 : vector<1x1x128xf32> to vector<1x128xf32>
    %121 = vector.shape_cast %118 : vector<1x128xf32> to vector<1x1x128xf32>
    tpu.vector_store %arg4[%c0_48, %c4_49, %c0_50], %121 {strides = array<i32>} : memref<1x16x128xf32, #tpu.memory_space<vmem>>, vector<1x1x128xf32>,
    %122 = arith.mulf %30, %74 : vector<32x128xf32>
    %c0_51 = arith.constant 0 : index
    %c5_52 = arith.constant 5 : index
    %c0_53 = arith.constant 0 : index
    %123 = vector.load %arg4[%c0_51, %c5_52, %c0_53] : memref<1x16x128xf32, #tpu.memory_space<vmem>>, vector<1x1x128xf32>
    %124 = vector.shape_cast %123 : vector<1x1x128xf32> to vector<1x128xf32>
    %cst_54 = arith.constant dense<0.000000e+00> : vector<128xf32>
    %125 = vector.multi_reduction <add>, %122, %cst_54 [0] : vector<32x128xf32> to vector<128xf32>
    %126 = vector.shape_cast %125 : vector<128xf32> to vector<1x128xf32>
    %127 = arith.addf %124, %126 : vector<1x128xf32>
    %c0_55 = arith.constant 0 : index
    %c5_56 = arith.constant 5 : index
    %c0_57 = arith.constant 0 : index
    %128 = vector.load %arg4[%c0_55, %c5_56, %c0_57] : memref<1x16x128xf32, #tpu.memory_space<vmem>>, vector<1x1x128xf32>
    %129 = vector.shape_cast %128 : vector<1x1x128xf32> to vector<1x128xf32>
    %130 = vector.shape_cast %127 : vector<1x128xf32> to vector<1x1x128xf32>
    tpu.vector_store %arg4[%c0_55, %c5_56, %c0_57], %130 {strides = array<i32>} : memref<1x16x128xf32, #tpu.memory_space<vmem>>, vector<1x1x128xf32>,
    %131 = arith.mulf %30, %75 : vector<32x128xf32>
    %c0_58 = arith.constant 0 : index
    %c6_59 = arith.constant 6 : index
    %c0_60 = arith.constant 0 : index
    %132 = vector.load %arg4[%c0_58, %c6_59, %c0_60] : memref<1x16x128xf32, #tpu.memory_space<vmem>>, vector<1x1x128xf32>
    %133 = vector.shape_cast %132 : vector<1x1x128xf32> to vector<1x128xf32>
    %cst_61 = arith.constant dense<0.000000e+00> : vector<128xf32>
    %134 = vector.multi_reduction <add>, %131, %cst_61 [0] : vector<32x128xf32> to vector<128xf32>
    %135 = vector.shape_cast %134 : vector<128xf32> to vector<1x128xf32>
    %136 = arith.addf %133, %135 : vector<1x128xf32>
    %c0_62 = arith.constant 0 : index
    %c6_63 = arith.constant 6 : index
    %c0_64 = arith.constant 0 : index
    %137 = vector.load %arg4[%c0_62, %c6_63, %c0_64] : memref<1x16x128xf32, #tpu.memory_space<vmem>>, vector<1x1x128xf32>
    %138 = vector.shape_cast %137 : vector<1x1x128xf32> to vector<1x128xf32>
    %139 = vector.shape_cast %136 : vector<1x128xf32> to vector<1x1x128xf32>
    tpu.vector_store %arg4[%c0_62, %c6_63, %c0_64], %139 {strides = array<i32>} : memref<1x16x128xf32, #tpu.memory_space<vmem>>, vector<1x1x128xf32>,
    %140 = arith.mulf %33, %73 : vector<32x128xf32>
    %c0_65 = arith.constant 0 : index
    %c7_66 = arith.constant 7 : index
    %c0_67 = arith.constant 0 : index
    %141 = vector.load %arg4[%c0_65, %c7_66, %c0_67] : memref<1x16x128xf32, #tpu.memory_space<vmem>>, vector<1x1x128xf32>
    %142 = vector.shape_cast %141 : vector<1x1x128xf32> to vector<1x128xf32>
    %cst_68 = arith.constant dense<0.000000e+00> : vector<128xf32>
    %143 = vector.multi_reduction <add>, %140, %cst_68 [0] : vector<32x128xf32> to vector<128xf32>
    %144 = vector.shape_cast %143 : vector<128xf32> to vector<1x128xf32>
    %145 = arith.addf %142, %144 : vector<1x128xf32>
    %c0_69 = arith.constant 0 : index
    %c7_70 = arith.constant 7 : index
    %c0_71 = arith.constant 0 : index
    %146 = vector.load %arg4[%c0_69, %c7_70, %c0_71] : memref<1x16x128xf32, #tpu.memory_space<vmem>>, vector<1x1x128xf32>
    %147 = vector.shape_cast %146 : vector<1x1x128xf32> to vector<1x128xf32>
    %148 = vector.shape_cast %145 : vector<1x128xf32> to vector<1x1x128xf32>
    tpu.vector_store %arg4[%c0_69, %c7_70, %c0_71], %148 {strides = array<i32>} : memref<1x16x128xf32, #tpu.memory_space<vmem>>, vector<1x1x128xf32>,
    %149 = arith.mulf %33, %74 : vector<32x128xf32>
    %c0_72 = arith.constant 0 : index
    %c8_73 = arith.constant 8 : index
    %c0_74 = arith.constant 0 : index
    %150 = vector.load %arg4[%c0_72, %c8_73, %c0_74] : memref<1x16x128xf32, #tpu.memory_space<vmem>>, vector<1x1x128xf32>
    %151 = vector.shape_cast %150 : vector<1x1x128xf32> to vector<1x128xf32>
    %cst_75 = arith.constant dense<0.000000e+00> : vector<128xf32>
    %152 = vector.multi_reduction <add>, %149, %cst_75 [0] : vector<32x128xf32> to vector<128xf32>
    %153 = vector.shape_cast %152 : vector<128xf32> to vector<1x128xf32>
    %154 = arith.addf %151, %153 : vector<1x128xf32>
    %c0_76 = arith.constant 0 : index
    %c8_77 = arith.constant 8 : index
    %c0_78 = arith.constant 0 : index
    %155 = vector.load %arg4[%c0_76, %c8_77, %c0_78] : memref<1x16x128xf32, #tpu.memory_space<vmem>>, vector<1x1x128xf32>
    %156 = vector.shape_cast %155 : vector<1x1x128xf32> to vector<1x128xf32>
    %157 = vector.shape_cast %154 : vector<1x128xf32> to vector<1x1x128xf32>
    tpu.vector_store %arg4[%c0_76, %c8_77, %c0_78], %157 {strides = array<i32>} : memref<1x16x128xf32, #tpu.memory_space<vmem>>, vector<1x1x128xf32>,
    %158 = arith.mulf %33, %75 : vector<32x128xf32>
    %c0_79 = arith.constant 0 : index
    %c9_80 = arith.constant 9 : index
    %c0_81 = arith.constant 0 : index
    %159 = vector.load %arg4[%c0_79, %c9_80, %c0_81] : memref<1x16x128xf32, #tpu.memory_space<vmem>>, vector<1x1x128xf32>
    %160 = vector.shape_cast %159 : vector<1x1x128xf32> to vector<1x128xf32>
    %cst_82 = arith.constant dense<0.000000e+00> : vector<128xf32>
    %161 = vector.multi_reduction <add>, %158, %cst_82 [0] : vector<32x128xf32> to vector<128xf32>
    %162 = vector.shape_cast %161 : vector<128xf32> to vector<1x128xf32>
    %163 = arith.addf %160, %162 : vector<1x128xf32>
    %c0_83 = arith.constant 0 : index
    %c9_84 = arith.constant 9 : index
    %c0_85 = arith.constant 0 : index
    %164 = vector.load %arg4[%c0_83, %c9_84, %c0_85] : memref<1x16x128xf32, #tpu.memory_space<vmem>>, vector<1x1x128xf32>
    %165 = vector.shape_cast %164 : vector<1x1x128xf32> to vector<1x128xf32>
    %166 = vector.shape_cast %163 : vector<1x128xf32> to vector<1x1x128xf32>
    tpu.vector_store %arg4[%c0_83, %c9_84, %c0_85], %166 {strides = array<i32>} : memref<1x16x128xf32, #tpu.memory_space<vmem>>, vector<1x1x128xf32>,
    %167 = arith.mulf %36, %73 : vector<32x128xf32>
    %c0_86 = arith.constant 0 : index
    %c10_87 = arith.constant 10 : index
    %c0_88 = arith.constant 0 : index
    %168 = vector.load %arg4[%c0_86, %c10_87, %c0_88] : memref<1x16x128xf32, #tpu.memory_space<vmem>>, vector<1x1x128xf32>
    %169 = vector.shape_cast %168 : vector<1x1x128xf32> to vector<1x128xf32>
    %cst_89 = arith.constant dense<0.000000e+00> : vector<128xf32>
    %170 = vector.multi_reduction <add>, %167, %cst_89 [0] : vector<32x128xf32> to vector<128xf32>
    %171 = vector.shape_cast %170 : vector<128xf32> to vector<1x128xf32>
    %172 = arith.addf %169, %171 : vector<1x128xf32>
    %c0_90 = arith.constant 0 : index
    %c10_91 = arith.constant 10 : index
    %c0_92 = arith.constant 0 : index
    %173 = vector.load %arg4[%c0_90, %c10_91, %c0_92] : memref<1x16x128xf32, #tpu.memory_space<vmem>>, vector<1x1x128xf32>
    %174 = vector.shape_cast %173 : vector<1x1x128xf32> to vector<1x128xf32>
    %175 = vector.shape_cast %172 : vector<1x128xf32> to vector<1x1x128xf32>
    tpu.vector_store %arg4[%c0_90, %c10_91, %c0_92], %175 {strides = array<i32>} : memref<1x16x128xf32, #tpu.memory_space<vmem>>, vector<1x1x128xf32>,
    %176 = arith.mulf %36, %74 : vector<32x128xf32>
    %c0_93 = arith.constant 0 : index
    %c11_94 = arith.constant 11 : index
    %c0_95 = arith.constant 0 : index
    %177 = vector.load %arg4[%c0_93, %c11_94, %c0_95] : memref<1x16x128xf32, #tpu.memory_space<vmem>>, vector<1x1x128xf32>
    %178 = vector.shape_cast %177 : vector<1x1x128xf32> to vector<1x128xf32>
    %cst_96 = arith.constant dense<0.000000e+00> : vector<128xf32>
    %179 = vector.multi_reduction <add>, %176, %cst_96 [0] : vector<32x128xf32> to vector<128xf32>
    %180 = vector.shape_cast %179 : vector<128xf32> to vector<1x128xf32>
    %181 = arith.addf %178, %180 : vector<1x128xf32>
    %c0_97 = arith.constant 0 : index
    %c11_98 = arith.constant 11 : index
    %c0_99 = arith.constant 0 : index
    %182 = vector.load %arg4[%c0_97, %c11_98, %c0_99] : memref<1x16x128xf32, #tpu.memory_space<vmem>>, vector<1x1x128xf32>
    %183 = vector.shape_cast %182 : vector<1x1x128xf32> to vector<1x128xf32>
    %184 = vector.shape_cast %181 : vector<1x128xf32> to vector<1x1x128xf32>
    tpu.vector_store %arg4[%c0_97, %c11_98, %c0_99], %184 {strides = array<i32>} : memref<1x16x128xf32, #tpu.memory_space<vmem>>, vector<1x1x128xf32>,
    %185 = arith.mulf %36, %75 : vector<32x128xf32>
    %c0_100 = arith.constant 0 : index
    %c12 = arith.constant 12 : index
    %c0_101 = arith.constant 0 : index
    %186 = vector.load %arg4[%c0_100, %c12, %c0_101] : memref<1x16x128xf32, #tpu.memory_space<vmem>>, vector<1x1x128xf32>
    %187 = vector.shape_cast %186 : vector<1x1x128xf32> to vector<1x128xf32>
    %cst_102 = arith.constant dense<0.000000e+00> : vector<128xf32>
    %188 = vector.multi_reduction <add>, %185, %cst_102 [0] : vector<32x128xf32> to vector<128xf32>
    %189 = vector.shape_cast %188 : vector<128xf32> to vector<1x128xf32>
    %190 = arith.addf %187, %189 : vector<1x128xf32>
    %c0_103 = arith.constant 0 : index
    %c12_104 = arith.constant 12 : index
    %c0_105 = arith.constant 0 : index
    %191 = vector.load %arg4[%c0_103, %c12_104, %c0_105] : memref<1x16x128xf32, #tpu.memory_space<vmem>>, vector<1x1x128xf32>
    %192 = vector.shape_cast %191 : vector<1x1x128xf32> to vector<1x128xf32>
    %193 = vector.shape_cast %190 : vector<1x128xf32> to vector<1x1x128xf32>
    tpu.vector_store %arg4[%c0_103, %c12_104, %c0_105], %193 {strides = array<i32>} : memref<1x16x128xf32, #tpu.memory_space<vmem>>, vector<1x1x128xf32>,
    %c1_i32_106 = arith.constant 1 : i32
    return
  }
  func.func @transform_0(%arg0: i32, %arg1: i32) -> i32 {
    %c0_i32 = arith.constant 0 : i32
    %c0_i32_0 = arith.constant 0 : i32
    return %c0_i32 : i32
  }
  func.func @transform_1(%arg0: i32, %arg1: i32) -> (i32, i32, i32) {
    %c1_i32 = arith.constant 1 : i32
    %0 = arith.muli %arg0, %c1_i32 : i32
    %1 = arith.addi %0, %arg1 : i32
    %c0_i32 = arith.constant 0 : i32
    %c0_i32_0 = arith.constant 0 : i32
    %c0_i32_1 = arith.constant 0 : i32
    return %c0_i32, %1, %c0_i32_0 : i32, i32, i32
  }
  func.func @transform_2(%arg0: i32, %arg1: i32) -> (i32, i32, i32) {
    %c0_i32 = arith.constant 0 : i32
    %c0_i32_0 = arith.constant 0 : i32
    %c0_i32_1 = arith.constant 0 : i32
    return %arg0, %c0_i32, %c0_i32_0 : i32, i32, i32
  }
}

</mosaic_0001>

<llo_original>
// kernel: tpu_custom_call.1
$region0: #{tpu_custom_call.1}
  #allocation0 [shape = 'u32[]', space=smem, size = 0x4, offset = 0x4, fixed_abs, tag = 'smem constant byte address 0x4 - core index']
  #allocation1 [shape = 'u32[72,128]{1,0:T(1,128)}', space=vmem, size = 0x9000, scoped, tag = 'internal scratch']
  %s0 = inlined_call_operand.hbm [shape: f32[16], index: 0, kind: input, shape index: {}]
  %s1 = inlined_call_operand.hbm [shape: f32[7,32,128], index: 1, kind: input, shape index: {}]
  %s2 = inlined_call_operand.hbm [shape: f32[1,16,128], index: 2, kind: output, shape index: {}]
  %s3 = sld [smem:[#allocation0]]
  $region30: #{tpu_custom_call.1} parent=0
    _
  %s5 = ssub.s32 1, %s3
  %s6 = scalar_select 0, %s5, %s3
  $region1: #{tpu_custom_call.1} parent=0
    #allocation2 [shape = 'u8[512]{0}', space=smem, size = 0x200, scoped, tag = 'input window, operand 0, single buffered']
    #allocation3 [shape = 's32[1]{0}', space=sflag, size = 0x4, scoped, tag = 'scoped memory for tpu_custom_call.1']
    #allocation4 [shape = 's32[1]{0}', space=sflag, size = 0x4, scoped, tag = 'scoped memory for tpu_custom_call.1']
    #allocation5 [shape = 's32[1]{0}', space=sflag, size = 0x4, scoped, tag = 'scoped memory for tpu_custom_call.1']
    #allocation6 [shape = 'u8[114688]{0}', space=vmem, size = 0x1c000, scoped, tag = 'input window, operand 1, single buffered']
    #allocation7 [shape = 'u8[8192]{0}', space=vmem, size = 0x2000, scoped, tag = 'output window, operand 0, single buffered']
    %7 = vsyncpa [#allocation5], 0
    %8 = vsyncpa [#allocation3], 0
    %9 = vsyncpa [#allocation4], 0
    // Predicated region
    $region2: #{tpu_custom_call.1} parent=1 // pred_check
      _
    $region3: #{tpu_custom_call.1} parent=1 // pred_check_branch
      %11 = sbr.rel (0) target = $region5
    $region4: #{tpu_custom_call.1} parent=1 // pred_region
      %13 = vsyncadd [#allocation5], 0
      %s15 = sshll.u32 %s0, 4
      %s16 = int_to_ptr.hbm [resolvable:$true] %s15
      %18 = dma.hbm_to_smem %s16, 16, [#allocation2], [#allocation5]
    $region5: #{tpu_custom_call.1} parent=1 // pred_fallthru
      _
    // Predicated region
    $region6: #{tpu_custom_call.1} parent=1 // pred_check
      _
    $region7: #{tpu_custom_call.1} parent=1 // pred_check_branch
      %20 = sbr.rel (0) target = $region9
    $region8: #{tpu_custom_call.1} parent=1 // pred_region
      %s21 = sadd.s32 0, 0
      %s22 = smul.u32 4, %s21
      %24 = vsyncadd [#allocation3], 0
      %s25 = smul.addr %s22, 8
      %s26 = scalar_lea.hbm %s1, %s25
      %s27 = sshll.u32 %s26, 4
      %s28 = int_to_ptr.hbm [resolvable:$true] %s27
      %s29 = sshll.u32 [#allocation6], 4
      %s30 = int_to_ptr.vmem [resolvable:$true] %s29
      %35 = dma.hbm_to_vmem [thread:$0]  %s28, 3584, %s30, [#allocation3], 128, 128, 8
    $region9: #{tpu_custom_call.1} parent=1 // pred_fallthru
      _
    // Predicated region
    $region10: #{tpu_custom_call.1} parent=1 // pred_check
      _
    $region11: #{tpu_custom_call.1} parent=1 // pred_check_branch
      %37 = sbr.rel (0) target = $region13
    $region12: #{tpu_custom_call.1} parent=1 // pred_region
      %39 = dma.done [#allocation5], 16
    $region13: #{tpu_custom_call.1} parent=1 // pred_fallthru
      _
    // Predicated region
    $region14: #{tpu_custom_call.1} parent=1 // pred_check
      _
    $region15: #{tpu_custom_call.1} parent=1 // pred_check_branch
      %41 = sbr.rel (0) target = $region17
    $region16: #{tpu_custom_call.1} parent=1 // pred_region
      %43 = dma.done [#allocation3], 3584
    $region17: #{tpu_custom_call.1} parent=1 // pred_fallthru
      _
    %44 = sfence
    %s45 = sadd.s32 0, 0
    %s46 = smul.u32 4, %s45
    %p47 = scmp.eq.s32.totalorder 0, 0
    // Predicated region
    $region18: #{tpu_custom_call.1} parent=1 // pred_check
      %p48 = pneg %p47
    $region19: #{tpu_custom_call.1} parent=1 // pred_check_branch
      %50 = sbr.rel (%p48) target = $region21
    $region20: #{tpu_custom_call.1} parent=1 // pred_region
      %51 = vst [vmem:[#allocation7] sm:$0xff] 0.0
      %52 = vst [vmem:[#allocation7 + $0x8] sm:$0xff] 0.0
    $region21: #{tpu_custom_call.1} parent=1 // pred_fallthru
      _
    %s53 = sld [smem:[#allocation2]]
    %s54 = sld [smem:[#allocation2 + $0x1]]
    %s55 = sld [smem:[#allocation2 + $0x2]]
    %s56 = sld [smem:[#allocation2 + $0x3]]
    %s57 = sld [smem:[#allocation2 + $0x4]]
    %s58 = sld [smem:[#allocation2 + $0x5]]
    %s59 = sld [smem:[#allocation2 + $0x6]]
    %s60 = sld [smem:[#allocation2 + $0x7]]
    %s61 = sld [smem:[#allocation2 + $0x8]]
    %s62 = sld [smem:[#allocation2 + $0x9]]
    %s63 = sld [smem:[#allocation2 + $0xa]]
    %s64 = sld [smem:[#allocation2 + $0xb]]
    %v65 = vld [vmem:[#allocation6] sm:$0xff]
    %v66 = vld [vmem:[#allocation6 + $0x8] sm:$0xff]
    %v67 = vld [vmem:[#allocation6 + $0x10] sm:$0xff]
    %v68 = vld [vmem:[#allocation6 + $0x18] sm:$0xff]
    %s69 = sadd.s32 0, 32
    %s70 = scalar_lea.vmem [#allocation6], %s69
    %v71 = vld [vmem:[%s70] sm:$0xff]
    %v72 = vld [vmem:[%s70 + $0x8] sm:$0xff]
    %v73 = vld [vmem:[%s70 + $0x10] sm:$0xff]
    %v74 = vld [vmem:[%s70 + $0x18] sm:$0xff]
    %s75 = sadd.s32 0, 64
    %s76 = scalar_lea.vmem [#allocation6], %s75
    %v77 = vld [vmem:[%s76] sm:$0xff]
    %v78 = vld [vmem:[%s76 + $0x8] sm:$0xff]
    %v79 = vld [vmem:[%s76 + $0x10] sm:$0xff]
    %v80 = vld [vmem:[%s76 + $0x18] sm:$0xff]
    %s81 = sadd.s32 0, 96
    %s82 = scalar_lea.vmem [#allocation6], %s81
    %v83 = vld [vmem:[%s82] sm:$0xff]
    %v84 = vld [vmem:[%s82 + $0x8] sm:$0xff]
    %v85 = vld [vmem:[%s82 + $0x10] sm:$0xff]
    %v86 = vld [vmem:[%s82 + $0x18] sm:$0xff]
    %s87 = sadd.s32 0, 128
    %s88 = scalar_lea.vmem [#allocation6], %s87
    %v89 = vld [vmem:[%s88] sm:$0xff]
    %v90 = vld [vmem:[%s88 + $0x8] sm:$0xff]
    %v91 = vld [vmem:[%s88 + $0x10] sm:$0xff]
    %v92 = vld [vmem:[%s88 + $0x18] sm:$0xff]
    %s93 = sadd.s32 0, 160
    %s94 = scalar_lea.vmem [#allocation6], %s93
    %v95 = vld [vmem:[%s94] sm:$0xff]
    %v96 = vld [vmem:[%s94 + $0x8] sm:$0xff]
    %v97 = vld [vmem:[%s94 + $0x10] sm:$0xff]
    %v98 = vld [vmem:[%s94 + $0x18] sm:$0xff]
    %s99 = sadd.s32 0, 192
    %s100 = scalar_lea.vmem [#allocation6], %s99
    %v101 = vld [vmem:[%s100] sm:$0xff]
    %v102 = vld [vmem:[%s100 + $0x8] sm:$0xff]
    %v103 = vld [vmem:[%s100 + $0x10] sm:$0xff]
    %v104 = vld [vmem:[%s100 + $0x18] sm:$0xff]
    %v105 = vstv %s53
    %v106 = vmul.f32 %v83, %v105
    %v107 = vmul.f32 %v84, %v105
    %v108 = vmul.f32 %v85, %v105
    %v109 = vmul.f32 %v86, %v105
    %v110 = vstv %s56
    %v111 = vmul.f32 %v89, %v110
    %v112 = vmul.f32 %v90, %v110
    %v113 = vmul.f32 %v91, %v110
    %v114 = vmul.f32 %v92, %v110
    %v115 = vadd.f32 %v106, %v111
    %v116 = vadd.f32 %v107, %v112
    %v117 = vadd.f32 %v108, %v113
    %v118 = vadd.f32 %v109, %v114
    %v119 = vstv %s59
    %v120 = vmul.f32 %v95, %v119
    %v121 = vmul.f32 %v96, %v119
    %v122 = vmul.f32 %v97, %v119
    %v123 = vmul.f32 %v98, %v119
    %v124 = vadd.f32 %v115, %v120
    %v125 = vadd.f32 %v116, %v121
    %v126 = vadd.f32 %v117, %v122
    %v127 = vadd.f32 %v118, %v123
    %v128 = vstv %s62
    %v129 = vadd.f32 %v124, %v128
    %v130 = vadd.f32 %v125, %v128
    %v131 = vadd.f32 %v126, %v128
    %v132 = vadd.f32 %v127, %v128
    %v133 = vsub.f32 %v129, %v65
    %v134 = vsub.f32 %v130, %v66
    %v135 = vsub.f32 %v131, %v67
    %v136 = vsub.f32 %v132, %v68
    %v137 = vstv %s54
    %v138 = vmul.f32 %v83, %v137
    %v139 = vmul.f32 %v84, %v137
    %v140 = vmul.f32 %v85, %v137
    %v141 = vmul.f32 %v86, %v137
    %v142 = vstv %s57
    %v143 = vmul.f32 %v89, %v142
    %v144 = vmul.f32 %v90, %v142
    %v145 = vmul.f32 %v91, %v142
    %v146 = vmul.f32 %v92, %v142
    %v147 = vadd.f32 %v138, %v143
    %v148 = vadd.f32 %v139, %v144
    %v149 = vadd.f32 %v140, %v145
    %v150 = vadd.f32 %v141, %v146
    %v151 = vstv %s60
    %v152 = vmul.f32 %v95, %v151
    %v153 = vmul.f32 %v96, %v151
    %v154 = vmul.f32 %v97, %v151
    %v155 = vmul.f32 %v98, %v151
    %v156 = vadd.f32 %v147, %v152
    %v157 = vadd.f32 %v148, %v153
    %v158 = vadd.f32 %v149, %v154
    %v159 = vadd.f32 %v150, %v155
    %v160 = vstv %s63
    %v161 = vadd.f32 %v156, %v160
    %v162 = vadd.f32 %v157, %v160
    %v163 = vadd.f32 %v158, %v160
    %v164 = vadd.f32 %v159, %v160
    %v165 = vsub.f32 %v161, %v71
    %v166 = vsub.f32 %v162, %v72
    %v167 = vsub.f32 %v163, %v73
    %v168 = vsub.f32 %v164, %v74
    %v169 = vstv %s55
    %v170 = vmul.f32 %v83, %v169
    %v171 = vmul.f32 %v84, %v169
    %v172 = vmul.f32 %v85, %v169
    %v173 = vmul.f32 %v86, %v169
    %v174 = vstv %s58
    %v175 = vmul.f32 %v89, %v174
    %v176 = vmul.f32 %v90, %v174
    %v177 = vmul.f32 %v91, %v174
    %v178 = vmul.f32 %v92, %v174
    %v179 = vadd.f32 %v170, %v175
    %v180 = vadd.f32 %v171, %v176
    %v181 = vadd.f32 %v172, %v177
    %v182 = vadd.f32 %v173, %v178
    %v183 = vstv %s61
    %v184 = vmul.f32 %v95, %v183
    %v185 = vmul.f32 %v96, %v183
    %v186 = vmul.f32 %v97, %v183
    %v187 = vmul.f32 %v98, %v183
    %v188 = vadd.f32 %v179, %v184
    %v189 = vadd.f32 %v180, %v185
    %v190 = vadd.f32 %v181, %v186
    %v191 = vadd.f32 %v182, %v187
    %v192 = vstv %s64
    %v193 = vadd.f32 %v188, %v192
    %v194 = vadd.f32 %v189, %v192
    %v195 = vadd.f32 %v190, %v192
    %v196 = vadd.f32 %v191, %v192
    %v197 = vsub.f32 %v193, %v77
    %v198 = vsub.f32 %v194, %v78
    %v199 = vsub.f32 %v195, %v79
    %v200 = vsub.f32 %v196, %v80
    %v201 = vmul.f32 %v101, %v133
    %v202 = vmul.f32 %v102, %v134
    %v203 = vmul.f32 %v103, %v135
    %v204 = vmul.f32 %v104, %v136
    %v205 = vmul.f32 %v101, %v165
    %v206 = vmul.f32 %v102, %v166
    %v207 = vmul.f32 %v103, %v167
    %v208 = vmul.f32 %v104, %v168
    %v209 = vmul.f32 %v101, %v197
    %v210 = vmul.f32 %v102, %v198
    %v211 = vmul.f32 %v103, %v199
    %v212 = vmul.f32 %v104, %v200
    %v213 = vmul.f32 %v133, %v201
    %v214 = vmul.f32 %v134, %v202
    %v215 = vmul.f32 %v135, %v203
    %v216 = vmul.f32 %v136, %v204
    %v217 = vmul.f32 %v165, %v205
    %v218 = vmul.f32 %v166, %v206
    %v219 = vmul.f32 %v167, %v207
    %v220 = vmul.f32 %v168, %v208
    %v221 = vadd.f32 %v213, %v217
    %v222 = vadd.f32 %v214, %v218
    %v223 = vadd.f32 %v215, %v219
    %v224 = vadd.f32 %v216, %v220
    %v225 = vmul.f32 %v197, %v209
    %v226 = vmul.f32 %v198, %v210
    %v227 = vmul.f32 %v199, %v211
    %v228 = vmul.f32 %v200, %v212
    %v229 = vadd.f32 %v221, %v225
    %v230 = vadd.f32 %v222, %v226
    %v231 = vadd.f32 %v223, %v227
    %v232 = vadd.f32 %v224, %v228
    %v233 = vld [vmem:[#allocation7] sm:$0x1]
    %v234 = vadd.f32 %v229, %v230
    %v235 = vadd.f32 %v234, %v231
    %v236 = vadd.f32 %v235, %v232
    %v237 = vrot.slane %v236, 4
    %v238 = vadd.f32 %v236, %v237
    %v239 = vrot.slane %v238, 2
    %v240 = vadd.f32 %v238, %v239
    %v241 = vrot.slane %v240, 1
    %v242 = vadd.f32 %v240, %v241
    %v243 = vadd.f32 %v233, %v242
    %244 = vst [vmem:[#allocation7] sm:$0x1] %v243
    %v245 = vld [vmem:[#allocation7 + $0x1] sm:$0x1]
    %v246 = vadd.f32 %v201, %v202
    %v247 = vadd.f32 %v246, %v203
    %v248 = vadd.f32 %v247, %v204
    %v249 = vrot.slane %v248, 4
    %v250 = vadd.f32 %v248, %v249
    %v251 = vrot.slane %v250, 2
    %v252 = vadd.f32 %v250, %v251
    %v253 = vrot.slane %v252, 1
    %v254 = vadd.f32 %v252, %v253
    %v255 = vadd.f32 %v245, %v254
    %256 = vst [vmem:[#allocation7 + $0x1] sm:$0x1] %v255
    %v257 = vld [vmem:[#allocation7 + $0x2] sm:$0x1]
    %v258 = vadd.f32 %v205, %v206
    %v259 = vadd.f32 %v258, %v207
    %v260 = vadd.f32 %v259, %v208
    %v261 = vrot.slane %v260, 4
    %v262 = vadd.f32 %v260, %v261
    %v263 = vrot.slane %v262, 2
    %v264 = vadd.f32 %v262, %v263
    %v265 = vrot.slane %v264, 1
    %v266 = vadd.f32 %v264, %v265
    %v267 = vadd.f32 %v257, %v266
    %268 = vst [vmem:[#allocation7 + $0x2] sm:$0x1] %v267
    %v269 = vld [vmem:[#allocation7 + $0x3] sm:$0x1]
    %v270 = vadd.f32 %v209, %v210
    %v271 = vadd.f32 %v270, %v211
    %v272 = vadd.f32 %v271, %v212
    %v273 = vrot.slane %v272, 4
    %v274 = vadd.f32 %v272, %v273
    %v275 = vrot.slane %v274, 2
    %v276 = vadd.f32 %v274, %v275
    %v277 = vrot.slane %v276, 1
    %v278 = vadd.f32 %v276, %v277
    %v279 = vadd.f32 %v269, %v278
    %280 = vst [vmem:[#allocation7 + $0x3] sm:$0x1] %v279
    %v281 = vmul.f32 %v83, %v201
    %v282 = vmul.f32 %v84, %v202
    %v283 = vmul.f32 %v85, %v203
    %v284 = vmul.f32 %v86, %v204
    %v285 = vld [vmem:[#allocation7 + $0x4] sm:$0x1]
    %v286 = vadd.f32 %v281, %v282
    %v287 = vadd.f32 %v286, %v283
    %v288 = vadd.f32 %v287, %v284
    %v289 = vrot.slane %v288, 4
    %v290 = vadd.f32 %v288, %v289
    %v291 = vrot.slane %v290, 2
    %v292 = vadd.f32 %v290, %v291
    %v293 = vrot.slane %v292, 1
    %v294 = vadd.f32 %v292, %v293
    %v295 = vadd.f32 %v285, %v294
    %296 = vst [vmem:[#allocation7 + $0x4] sm:$0x1] %v295
    %v297 = vmul.f32 %v83, %v205
    %v298 = vmul.f32 %v84, %v206
    %v299 = vmul.f32 %v85, %v207
    %v300 = vmul.f32 %v86, %v208
    %v301 = vld [vmem:[#allocation7 + $0x5] sm:$0x1]
    %v302 = vadd.f32 %v297, %v298
    %v303 = vadd.f32 %v302, %v299
    %v304 = vadd.f32 %v303, %v300
    %v305 = vrot.slane %v304, 4
    %v306 = vadd.f32 %v304, %v305
    %v307 = vrot.slane %v306, 2
    %v308 = vadd.f32 %v306, %v307
    %v309 = vrot.slane %v308, 1
    %v310 = vadd.f32 %v308, %v309
    %v311 = vadd.f32 %v301, %v310
    %312 = vst [vmem:[#allocation7 + $0x5] sm:$0x1] %v311
    %v313 = vmul.f32 %v83, %v209
    %v314 = vmul.f32 %v84, %v210
    %v315 = vmul.f32 %v85, %v211
    %v316 = vmul.f32 %v86, %v212
    %v317 = vld [vmem:[#allocation7 + $0x6] sm:$0x1]
    %v318 = vadd.f32 %v313, %v314
    %v319 = vadd.f32 %v318, %v315
    %v320 = vadd.f32 %v319, %v316
    %v321 = vrot.slane %v320, 4
    %v322 = vadd.f32 %v320, %v321
    %v323 = vrot.slane %v322, 2
    %v324 = vadd.f32 %v322, %v323
    %v325 = vrot.slane %v324, 1
    %v326 = vadd.f32 %v324, %v325
    %v327 = vadd.f32 %v317, %v326
    %328 = vst [vmem:[#allocation7 + $0x6] sm:$0x1] %v327
    %v329 = vmul.f32 %v89, %v201
    %v330 = vmul.f32 %v90, %v202
    %v331 = vmul.f32 %v91, %v203
    %v332 = vmul.f32 %v92, %v204
    %v333 = vld [vmem:[#allocation7 + $0x7] sm:$0x1]
    %v334 = vadd.f32 %v329, %v330
    %v335 = vadd.f32 %v334, %v331
    %v336 = vadd.f32 %v335, %v332
    %v337 = vrot.slane %v336, 4
    %v338 = vadd.f32 %v336, %v337
    %v339 = vrot.slane %v338, 2
    %v340 = vadd.f32 %v338, %v339
    %v341 = vrot.slane %v340, 1
    %v342 = vadd.f32 %v340, %v341
    %v343 = vadd.f32 %v333, %v342
    %344 = vst [vmem:[#allocation7 + $0x7] sm:$0x1] %v343
    %v345 = vmul.f32 %v89, %v205
    %v346 = vmul.f32 %v90, %v206
    %v347 = vmul.f32 %v91, %v207
    %v348 = vmul.f32 %v92, %v208
    %v349 = vld [vmem:[#allocation7 + $0x8] sm:$0x1]
    %v350 = vadd.f32 %v345, %v346
    %v351 = vadd.f32 %v350, %v347
    %v352 = vadd.f32 %v351, %v348
    %v353 = vrot.slane %v352, 4
    %v354 = vadd.f32 %v352, %v353
    %v355 = vrot.slane %v354, 2
    %v356 = vadd.f32 %v354, %v355
    %v357 = vrot.slane %v356, 1
    %v358 = vadd.f32 %v356, %v357
    %v359 = vadd.f32 %v349, %v358
    %360 = vst [vmem:[#allocation7 + $0x8] sm:$0x1] %v359
    %v361 = vmul.f32 %v89, %v209
    %v362 = vmul.f32 %v90, %v210
    %v363 = vmul.f32 %v91, %v211
    %v364 = vmul.f32 %v92, %v212
    %v365 = vld [vmem:[#allocation7 + $0x9] sm:$0x1]
    %v366 = vadd.f32 %v361, %v362
    %v367 = vadd.f32 %v366, %v363
    %v368 = vadd.f32 %v367, %v364
    %v369 = vrot.slane %v368, 4
    %v370 = vadd.f32 %v368, %v369
    %v371 = vrot.slane %v370, 2
    %v372 = vadd.f32 %v370, %v371
    %v373 = vrot.slane %v372, 1
    %v374 = vadd.f32 %v372, %v373
    %v375 = vadd.f32 %v365, %v374
    %376 = vst [vmem:[#allocation7 + $0x9] sm:$0x1] %v375
    %v377 = vmul.f32 %v95, %v201
    %v378 = vmul.f32 %v96, %v202
    %v379 = vmul.f32 %v97, %v203
    %v380 = vmul.f32 %v98, %v204
    %v381 = vld [vmem:[#allocation7 + $0xa] sm:$0x1]
    %v382 = vadd.f32 %v377, %v378
    %v383 = vadd.f32 %v382, %v379
    %v384 = vadd.f32 %v383, %v380
    %v385 = vrot.slane %v384, 4
    %v386 = vadd.f32 %v384, %v385
    %v387 = vrot.slane %v386, 2
    %v388 = vadd.f32 %v386, %v387
    %v389 = vrot.slane %v388, 1
    %v390 = vadd.f32 %v388, %v389
    %v391 = vadd.f32 %v381, %v390
    %392 = vst [vmem:[#allocation7 + $0xa] sm:$0x1] %v391
    %v393 = vmul.f32 %v95, %v205
    %v394 = vmul.f32 %v96, %v206
    %v395 = vmul.f32 %v97, %v207
    %v396 = vmul.f32 %v98, %v208
    %v397 = vld [vmem:[#allocation7 + $0xb] sm:$0x1]
    %v398 = vadd.f32 %v393, %v394
    %v399 = vadd.f32 %v398, %v395
    %v400 = vadd.f32 %v399, %v396
    %v401 = vrot.slane %v400, 4
    %v402 = vadd.f32 %v400, %v401
    %v403 = vrot.slane %v402, 2
    %v404 = vadd.f32 %v402, %v403
    %v405 = vrot.slane %v404, 1
    %v406 = vadd.f32 %v404, %v405
    %v407 = vadd.f32 %v397, %v406
    %408 = vst [vmem:[#allocation7 + $0xb] sm:$0x1] %v407
    %v409 = vmul.f32 %v95, %v209
    %v410 = vmul.f32 %v96, %v210
    %v411 = vmul.f32 %v97, %v211
    %v412 = vmul.f32 %v98, %v212
    %v413 = vld [vmem:[#allocation7 + $0xc] sm:$0x1]
    %v414 = vadd.f32 %v409, %v410
    %v415 = vadd.f32 %v414, %v411
    %v416 = vadd.f32 %v415, %v412
    %v417 = vrot.slane %v416, 4
    %v418 = vadd.f32 %v416, %v417
    %v419 = vrot.slane %v418, 2
    %v420 = vadd.f32 %v418, %v419
    %v421 = vrot.slane %v420, 1
    %v422 = vadd.f32 %v420, %v421
    %v423 = vadd.f32 %v413, %v422
    %424 = vst [vmem:[#allocation7 + $0xc] sm:$0x1] %v423
    // Predicated region
    $region22: #{tpu_custom_call.1} parent=1 // pred_check
      _
    $region23: #{tpu_custom_call.1} parent=1 // pred_check_branch
      %426 = sbr.rel (0) target = $region25
    $region24: #{tpu_custom_call.1} parent=1 // pred_region
      %428 = vsyncadd [#allocation4], 0
      %s429 = sshll.u32 [#allocation7], 4
      %s430 = int_to_ptr.vmem [resolvable:$true] %s429
      %s431 = sshll.u32 %s2, 4
      %s432 = int_to_ptr.hbm [resolvable:$true] %s431
      %437 = dma.vmem_to_hbm [thread:$0]  %s430, 256, %s432, [#allocation4], 128, 128, 8
    $region25: #{tpu_custom_call.1} parent=1 // pred_fallthru
      _
    // Predicated region
    $region26: #{tpu_custom_call.1} parent=1 // pred_check
      _
    $region27: #{tpu_custom_call.1} parent=1 // pred_check_branch
      %439 = sbr.rel (0) target = $region29
    $region28: #{tpu_custom_call.1} parent=1 // pred_region
      %441 = dma.done [#allocation4], 256
    $region29: #{tpu_custom_call.1} parent=1 // pred_fallthru
      _
    %442 = vsyncpa [#allocation3], 1
    %443 = vsyncpa [#allocation4], 1
    %444 = vsyncpa [#allocation5], 1

</llo_original>
